<compile_context>
chip_gen: v7x
topology: tpu7x:2x2x1
jax: 0.10.0
libtpu: 0.0.40
codegen_flags: <defaults>
</compile_context>

<pallas_src>
import math

import jax
import jax.numpy as jnp
from jax.experimental import pallas as pl
from jax.experimental.pallas import tpu as pltpu


# ---------------------------------------------------------------------------
# Helpers
# ---------------------------------------------------------------------------

def _round_up(x, m):
    return ((x + m - 1) // m) * m


def _sublane(itemsize):
    # Sublane packing granularity: f32 -> 8, bf16/f16 -> 16, int8/fp8 -> 32.
    return {4: 8, 2: 16, 1: 32}.get(itemsize, 8)


def _vmem_capacity_bytes():
    try:
        info = pltpu.get_tpu_info()
        cap = getattr(info, "vmem_capacity_bytes", None)
        if cap:
            return int(cap)
    except Exception:
        pass
    return 64 * 1024 * 1024  # conservative default (v7x per-TensorCore)


def _divisor_tile(total, target, unit):
    """Largest multiple of `unit` that divides `total` and is <= max(target, unit)."""
    assert total % unit == 0
    m = total // unit
    cap = max(target // unit, 1)
    best = 1
    for d in range(1, m + 1):
        if m % d == 0 and d <= cap:
            best = d
    return best * unit


# ---------------------------------------------------------------------------
# Kernels
# ---------------------------------------------------------------------------

def _linear_kernel_resident(x_ref, w_ref, b_ref, o_ref):
    # Whole (K_pad, O_pad) W^T and bias stay VMEM-resident (constant index map);
    # one MXU pass per row tile, no reduction loop, no accumulator scratch.
    o_ref[...] = (
        jnp.dot(x_ref[...], w_ref[...], preferred_element_type=jnp.float32)
        + b_ref[...].astype(jnp.float32)
    ).astype(o_ref.dtype)


def _linear_kernel_tiled_f32(x_ref, w_ref, b_ref, o_ref):
    # f32 output: accumulate directly into the output block (resident across k);
    # bias is folded into the k==0 init, so there is no epilogue add/copy.
    k = pl.program_id(2)

    @pl.when(k == 0)
    def _():
        o_ref[...] = jnp.broadcast_to(b_ref[...], o_ref.shape)

    o_ref[...] += jnp.dot(x_ref[...], w_ref[...], preferred_element_type=jnp.float32)


def _linear_kernel_tiled_acc(x_ref, w_ref, b_ref, o_ref, acc_ref):
    # Non-f32 output: f32 scratch accumulator (bias folded into init), single
    # cast/store at the last k step.
    k = pl.program_id(2)

    @pl.when(k == 0)
    def _():
        acc_ref[...] = jnp.broadcast_to(b_ref[...].astype(jnp.float32), acc_ref.shape)

    acc_ref[...] += jnp.dot(x_ref[...], w_ref[...], preferred_element_type=jnp.float32)

    @pl.when(k == pl.num_programs(2) - 1)
    def _():
        o_ref[...] = acc_ref[...].astype(o_ref.dtype)


# ---------------------------------------------------------------------------
# Wrapper
# ---------------------------------------------------------------------------

def prepare_linear_params(weight, bias=None, compute_dtype=None):
    """Once-per-model work hoisted out of the forward path.

    Pads (out_dim, in_dim) weight to 128-multiples, transposes to
    (K_pad, O_pad), pads bias to (1, O_pad). Optionally casts to
    `compute_dtype` (e.g. bf16) for MXU-native matmul.
    """
    O, K = weight.shape
    if compute_dtype is not None:
        weight = weight.astype(compute_dtype)
    dtype = weight.dtype
    K_pad = _round_up(K, 128)
    O_pad = _round_up(O, 128)

    w = weight
    if (O_pad, K_pad) != (O, K):
        w = jnp.pad(w, ((0, O_pad - O), (0, K_pad - K)))
    w_t = jnp.asarray(w.T)  # (K_pad, O_pad), materialized once at init

    b = jnp.zeros((O,), dtype) if bias is None else bias.astype(dtype)
    if O_pad != O:
        b = jnp.pad(b, (0, O_pad - O))
    b_p = b.reshape(1, O_pad)
    return w_t, b_p, O, K


def pallas_linear(x, w_t, b_p, out_dim, *, tm=512, tn=512, tk=None):
    """y = x @ W.T + b with pre-transposed/padded params (see prepare_linear_params)."""
    N, K = x.shape
    K_pad, O_pad = w_t.shape
    assert K <= K_pad, "x in_dim exceeds prepared weight in_dim"

    if x.dtype != w_t.dtype:
        x = x.astype(w_t.dtype)
    itemsize = jnp.dtype(x.dtype).itemsize
    out_dtype = x.dtype
    out_itemsize = jnp.dtype(out_dtype).itemsize
    sub = _sublane(itemsize)

    phys_vmem = _vmem_capacity_bytes()
    budget = min(int(phys_vmem * 0.7), 96 * 1024 * 1024)

    # ------------------ preferred path: weight-resident, 1-D grid --------------
    def resident_usage(tm_):
        return (2 * tm_ * K_pad * itemsize          # x tile (double-buffered)
                + 2 * K_pad * O_pad * itemsize      # W^T (2 bufs, conservative)
                + 2 * 8 * O_pad * itemsize          # bias
                + 2 * tm_ * O_pad * out_itemsize)   # output tile (double-buffered)

    tm_res = min(tm, _round_up(N, sub))
    while resident_usage(tm_res) > budget and tm_res > sub:
        tm_res = max(sub, _round_up(tm_res // 2, sub))

    if resident_usage(tm_res) <= budget:
        # Keep >= 2 row tiles so both TensorCores get work on v7x.
        if _round_up(N, tm_res) // tm_res < 2 and tm_res > sub and N > sub:
            tm_res = max(sub, _round_up(tm_res // 2, sub))
        N_pad = _round_up(N, tm_res)

        x_p = x if (N_pad, K_pad) == (N, K) else jnp.pad(
            x, ((0, N_pad - N), (0, K_pad - K)))

        usage = resident_usage(tm_res)
        cost = pl.CostEstimate(
            flops=2 * N_pad * K_pad * O_pad,
            transcendentals=0,
            bytes_accessed=(x_p.size * itemsize + w_t.size * itemsize
                            + b_p.size * itemsize + N_pad * O_pad * out_itemsize),
        )
        y_p = pl.pallas_call(
            _linear_kernel_resident,
            out_shape=jax.ShapeDtypeStruct((N_pad, O_pad), out_dtype),
            grid_spec=pltpu.PrefetchScalarGridSpec(
                num_scalar_prefetch=0,
                grid=(N_pad // tm_res,),
                in_specs=[
                    pl.BlockSpec((tm_res, K_pad), lambda i: (i, 0)),  # stream x once
                    pl.BlockSpec((K_pad, O_pad), lambda i: (0, 0)),   # resident W^T
                    pl.BlockSpec((1, O_pad), lambda i: (0, 0)),       # resident bias
                ],
                out_specs=pl.BlockSpec((tm_res, O_pad), lambda i: (i, 0)),
            ),
            compiler_params=pltpu.CompilerParams(
                dimension_semantics=("parallel",),
                vmem_limit_bytes=min(max(2 * usage, 32 * 1024 * 1024),
                                     int(phys_vmem * 0.9)),
            ),
            cost_estimate=cost,
        )(x_p, w_t, b_p)

    # ------------------ fallback: (M, N, K) tiled reduction grid ---------------
    else:
        tn_t = _divisor_tile(O_pad, tn, 128)
        tk_target = tk if tk is not None else (2048 if itemsize == 2 else 1024)
        tk_t = _divisor_tile(K_pad, tk_target, 128)
        tm_t = min(tm, _round_up(N, sub))
        use_scratch = out_dtype != jnp.float32

        def tiled_usage(tm_, tn_, tk_):
            u = (2 * tm_ * tk_ * itemsize + 2 * tk_ * tn_ * itemsize
                 + 2 * 8 * tn_ * itemsize + 2 * tm_ * tn_ * out_itemsize)
            if use_scratch:
                u += tm_ * tn_ * 4
            return u

        while tiled_usage(tm_t, tn_t, tk_t) > budget:
            if tm_t > sub:
                tm_t = max(sub, _round_up(tm_t // 2, sub))
            elif tk_t > 128:
                tk_t = _divisor_tile(K_pad, tk_t // 2, 128)
            elif tn_t > 128:
                tn_t = _divisor_tile(O_pad, tn_t // 2, 128)
            else:
                break

        N_pad = _round_up(N, tm_t)
        if (N_pad // tm_t) * (O_pad // tn_t) < 2 and tm_t > sub and N > sub:
            tm_t = max(sub, _round_up(tm_t // 2, sub))
            N_pad = _round_up(N, tm_t)

        x_p = x if (N_pad, K_pad) == (N, K) else jnp.pad(
            x, ((0, N_pad - N), (0, K_pad - K)))

        grid = (N_pad // tm_t, O_pad // tn_t, K_pad // tk_t)
        usage = tiled_usage(tm_t, tn_t, tk_t)
        cost = pl.CostEstimate(
            flops=2 * N_pad * K_pad * O_pad,
            transcendentals=0,
            bytes_accessed=(x_p.size * itemsize * grid[1]      # x re-read per out tile col
                            + w_t.size * itemsize * grid[0]    # W re-read per row tile
                            + b_p.size * itemsize
                            + N_pad * O_pad * out_itemsize),
        )
        kernel = _linear_kernel_tiled_acc if use_scratch else _linear_kernel_tiled_f32
        scratch = [pltpu.VMEM((tm_t, tn_t), jnp.float32)] if use_scratch else []
        y_p = pl.pallas_call(
            kernel,
            out_shape=jax.ShapeDtypeStruct((N_pad, O_pad), out_dtype),
            grid_spec=pltpu.PrefetchScalarGridSpec(
                num_scalar_prefetch=0,
                grid=grid,
                in_specs=[
                    pl.BlockSpec((tm_t, tk_t), lambda i, j, k: (i, k)),
                    pl.BlockSpec((tk_t, tn_t), lambda i, j, k: (k, j)),
                    pl.BlockSpec((1, tn_t), lambda i, j, k: (0, j)),
                ],
                out_specs=pl.BlockSpec((tm_t, tn_t), lambda i, j, k: (i, j)),
                scratch_shapes=scratch,
            ),
            compiler_params=pltpu.CompilerParams(
                dimension_semantics=("parallel", "parallel", "arbitrary"),
                vmem_limit_bytes=min(max(2 * usage, 32 * 1024 * 1024),
                                     int(phys_vmem * 0.9)),
            ),
            cost_estimate=cost,
        )(x_p, w_t, b_p)

    if (N_pad, O_pad) == (N, out_dim):
        return y_p
    return y_p[:N, :out_dim]


class PallasLinear:
    """Mirror of GraphGPS `Linear` (PyG Linear, kaiming_uniform weight, zeros bias).

    Parameter pad/transpose is done ONCE here; __call__ only runs the kernel.
    """

    def __init__(self, weight, bias=None, *, compute_dtype=None,
                 tm=512, tn=512, tk=None):
        self.w_t, self.b_p, self.out_dim, self.in_dim = prepare_linear_params(
            weight, bias, compute_dtype)
        self._tm, self._tn, self._tk = tm, tn, tk

    def __call__(self, x):
        assert x.shape[-1] == self.in_dim, "in_dim mismatch"
        lead = x.shape[:-1]
        x2 = x.reshape(-1, self.in_dim)
        y2 = pallas_linear(x2, self.w_t, self.b_p, self.out_dim,
                           tm=self._tm, tn=self._tn, tk=self._tk)
        return y2.reshape(*lead, self.out_dim)


def kaiming_uniform(key, out_dim, in_dim, dtype=jnp.float32):
    # PyTorch kaiming_uniform_ with a=sqrt(5) (Linear default):
    # bound = sqrt(6 / ((1 + a^2) * fan_in)) = sqrt(1 / fan_in)
    bound = math.sqrt(1.0 / in_dim)
    return jax.random.uniform(
        key, (out_dim, in_dim), dtype=dtype, minval=-bound, maxval=bound
    )


if __name__ == "__main__":
    key = jax.random.PRNGKey(0)
    k_x, k_w = jax.random.split(key)

    # Small synthetic graph: 64 nodes, 32-dim input features, 16-dim output.
    N, in_dim, out_dim = 64, 32, 16

    x = jax.random.normal(k_x, (N, in_dim), dtype=jnp.float32)
    weight = kaiming_uniform(k_w, out_dim, in_dim)       # kaiming_uniform init
    bias = jnp.zeros((out_dim,), dtype=jnp.float32)      # zeros init

    lin = PallasLinear(weight, bias)                     # pad/transpose hoisted here
    y = jax.block_until_ready(lin(x))

    # Correctness check against plain JAX reference.
    y_ref = x @ weight.T + bias
    assert y.shape == (N, out_dim)
    assert jnp.allclose(y, y_ref, atol=1e-5, rtol=1e-5)

    print("KERNEL_OK")
</pallas_src>

<mosaic_0001>
module attributes {stable_mosaic.version = 11 : i64} {
  func.func @_linear_kernel_resident(%arg0: i32, %arg1: memref<32x128xf32, #tpu.memory_space<vmem>>, %arg2: memref<128x128xf32, #tpu.memory_space<vmem>>, %arg3: memref<1x128xf32, #tpu.memory_space<vmem>>, %arg4: memref<32x128xf32, #tpu.memory_space<vmem>>) attributes {dimension_semantics = [#tpu.dimension_semantics<parallel>], iteration_bounds = array<i64: 2>, scalar_prefetch = 0 : i64, scratch_operands = 0 : i64, tpu.core_type = #tpu.core_type<tc>, window_params = [{transform_indices = @transform_0, window_bounds = array<i64: 32, 128>}, {pipeline_mode = #tpu.pipeline_mode<synchronous>, transform_indices = @transform_1, window_bounds = array<i64: 128, 128>}, {pipeline_mode = #tpu.pipeline_mode<synchronous>, transform_indices = @transform_2, window_bounds = array<i64: 1, 128>}, {transform_indices = @transform_3, window_bounds = array<i64: 32, 128>}]} {
    %c0 = arith.constant 0 : index
    %c0_0 = arith.constant 0 : index
    %0 = vector.load %arg1[%c0, %c0_0] : memref<32x128xf32, #tpu.memory_space<vmem>>, vector<32x128xf32>
    %c0_1 = arith.constant 0 : index
    %c0_2 = arith.constant 0 : index
    %1 = vector.load %arg2[%c0_1, %c0_2] : memref<128x128xf32, #tpu.memory_space<vmem>>, vector<128x128xf32>
    %cst = arith.constant dense<0.000000e+00> : vector<32x128xf32>
    %2 = tpu.matmul %0, %1, %cst {dimension_numbers = #tpu.dot_dimension_numbers<[1], [0], [0], [1], [0, 0, 1, 1], [], []>} : vector<32x128xf32>, vector<128x128xf32>, vector<32x128xf32> -> vector<32x128xf32>
    %c0_3 = arith.constant 0 : index
    %c0_4 = arith.constant 0 : index
    %3 = vector.load %arg3[%c0_3, %c0_4] : memref<1x128xf32, #tpu.memory_space<vmem>>, vector<1x128xf32>
    %4 = vector.broadcast %3 : vector<1x128xf32> to vector<32x128xf32>
    %5 = arith.addf %2, %4 : vector<32x128xf32>
    %c0_5 = arith.constant 0 : index
    %c0_6 = arith.constant 0 : index
    %6 = vector.load %arg4[%c0_5, %c0_6] : memref<32x128xf32, #tpu.memory_space<vmem>>, vector<32x128xf32>
    tpu.vector_store %arg4[%c0_5, %c0_6], %5 {strides = array<i32>} : memref<32x128xf32, #tpu.memory_space<vmem>>, vector<32x128xf32>,
    return
  }
  func.func @transform_0(%arg0: i32) -> (i32, i32) {
    %c0_i32 = arith.constant 0 : i32
    %c0_i32_0 = arith.constant 0 : i32
    return %arg0, %c0_i32 : i32, i32
  }
  func.func @transform_1(%arg0: i32) -> (i32, i32) {
    %c0_i32 = arith.constant 0 : i32
    %c0_i32_0 = arith.constant 0 : i32
    %c0_i32_1 = arith.constant 0 : i32
    return %c0_i32, %c0_i32_0 : i32, i32
  }
  func.func @transform_2(%arg0: i32) -> (i32, i32) {
    %c0_i32 = arith.constant 0 : i32
    %c0_i32_0 = arith.constant 0 : i32
    %c0_i32_1 = arith.constant 0 : i32
    return %c0_i32, %c0_i32_0 : i32, i32
  }
  func.func @transform_3(%arg0: i32) -> (i32, i32) {
    %c0_i32 = arith.constant 0 : i32
    %c0_i32_0 = arith.constant 0 : i32
    return %arg0, %c0_i32 : i32, i32
  }
}

</mosaic_0001>

<llo_original>
// kernel: tpu_custom_call.1
$region0: #{tpu_custom_call.1}
  #allocation0 [shape = 'u32[]', space=smem, size = 0x4, offset = 0x4, fixed_abs, tag = 'smem constant byte address 0x4 - core index']
  #allocation1 [shape = 'u32[144,128]{1,0:T(1,128)}', space=vmem, size = 0x12000, scoped, tag = 'internal scratch']
  %s0 = inlined_call_operand.hbm [shape: f32[64,128], index: 0, kind: input, shape index: {}]
  %s1 = inlined_call_operand.hbm [shape: f32[128,128], index: 1, kind: input, shape index: {}]
  %s2 = inlined_call_operand.vmem [shape: f32[1,128], index: 2, kind: input, shape index: {}]
  %s3 = inlined_call_operand.hbm [shape: f32[64,128], index: 3, kind: output, shape index: {}]
  %s4 = sld [smem:[#allocation0]]
  $region53: #{tpu_custom_call.1} parent=0
    _
  %s6 = ssub.s32 1, %s4
  %s7 = scalar_select 0, %s6, %s4
  $region1: #{tpu_custom_call.1} parent=0
    #allocation2 [shape = 'u8[32768]{0}', space=vmem, size = 0x8000, scoped, tag = 'input window, operand 0']
    #allocation3 [shape = 's32[2]{0}', space=sflag, size = 0x8, scoped, tag = 'scoped memory for tpu_custom_call.1']
    #allocation4 [shape = 's32[2]{0}', space=sflag, size = 0x8, scoped, tag = 'scoped memory for tpu_custom_call.1']
    #allocation5 [shape = 'u8[65536]{0}', space=vmem, size = 0x10000, scoped, tag = 'input window, operand 1, single buffered']
    #allocation6 [shape = 's32[1]{0}', space=sflag, size = 0x4, scoped, tag = 'scoped memory for tpu_custom_call.1']
    #allocation7 [shape = 'u8[32768]{0}', space=vmem, size = 0x8000, scoped, tag = 'output window, operand 0']
    %8 = vsyncpa [#allocation3], 0
    %s9 = scalar_lea.sflag [#allocation3], 1
    %10 = vsyncpa %s9, 0
    %11 = vsyncpa [#allocation6], 0
    %12 = vsyncpa [#allocation4], 0
    %s13 = scalar_lea.sflag [#allocation4], 1
    %14 = vsyncpa %s13, 0
    loop: start=0, step=1, limit=4
    $region2: #{tpu_custom_call.1} parent=1 // loop_pre_header
      _
    $region3: #{tpu_custom_call.1} parent=1 // loop_header
      %s16 = sphi 0, %s20
      %p17 = scmp.ge.s32.totalorder %s16, 4
      %s26 = sphi 0, %s28
      %s29 = sphi 0, %s26
      %s30 = sphi 0, %s29
      %s46 = sphi 0, %s30
      %s50 = sphi 0, %s50
      %s52 = sphi 0, %s50
      %s53 = sphi 0, %s52
      %s67 = sphi 0, %s53
      %s71 = sphi 0, %s71
      %s73 = sphi 0, %s71
      %s74 = sphi 0, %s73
      %s88 = sphi 0, %s74
      %s94 = sphi 0, %s96
      %s97 = sphi 0, %s94
      %s98 = sphi 0, %s97
      %s114 = sphi 0, %s98
    $region4: #{tpu_custom_call.1} parent=1 // loop_header_branch
      %19 = sbr.rel (%p17) target = $region8
    $region5: #{tpu_custom_call.1} parent=1 // loop_body
      %s21 = ssub.s32 %s16, 1
      %s22 = ssub.s32 %s16, 2
      %s23 = sadd.s32 %s16, 1
      %s24 = ssub.s32 %s16, %s23
      %p25 = scmp.eq.s32.totalorder %s24, 0
      %s27 = sadd.s32 %s26, 1
      %s28 = scalar_select %p25, %s26, %s27
      %p31 = pneg %p25
      %p32 = scmp.eq.s32.totalorder %s16, 1
      %p33 = por %p31, %p32
      %p34 = scmp.ne.s32.totalorder %s26, %s29
      %p35 = scmp.eq.s32.totalorder %s16, 0
      %p36 = por %p34, %p35
      %p37 = scmp.ne.s32.totalorder %s26, %s29
      %p38 = scmp.eq.s32.totalorder %s21, 1
      %p39 = por %p37, %p38
      %p40 = scmp.ne.s32.totalorder %s29, %s30
      %p41 = scmp.eq.s32.totalorder %s21, 0
      %p42 = por %p40, %p41
      %p43 = scmp.ne.s32.totalorder %s29, %s30
      %p44 = scmp.eq.s32.totalorder %s22, 1
      %p45 = por %p43, %p44
      %p47 = scmp.ne.s32.totalorder %s30, %s46
      %p48 = scmp.eq.s32.totalorder %s22, 0
      %p49 = por %p47, %p48
      %s51 = sadd.s32 %s50, 1
      %p54 = scmp.eq.s32.totalorder %s16, 1
      %p55 = scmp.ne.s32.totalorder %s50, %s52
      %p56 = scmp.eq.s32.totalorder %s16, 0
      %p57 = por %p55, %p56
      %p58 = scmp.ne.s32.totalorder %s50, %s52
      %p59 = scmp.eq.s32.totalorder %s21, 1
      %p60 = por %p58, %p59
      %p61 = scmp.ne.s32.totalorder %s52, %s53
      %p62 = scmp.eq.s32.totalorder %s21, 0
      %p63 = por %p61, %p62
      %p64 = scmp.ne.s32.totalorder %s52, %s53
      %p65 = scmp.eq.s32.totalorder %s22, 1
      %p66 = por %p64, %p65
      %p68 = scmp.ne.s32.totalorder %s53, %s67
      %p69 = scmp.eq.s32.totalorder %s22, 0
      %p70 = por %p68, %p69
      %s72 = sadd.s32 %s71, 1
      %p75 = scmp.eq.s32.totalorder %s16, 1
      %p76 = scmp.ne.s32.totalorder %s71, %s73
      %p77 = scmp.eq.s32.totalorder %s16, 0
      %p78 = por %p76, %p77
      %p79 = scmp.ne.s32.totalorder %s71, %s73
      %p80 = scmp.eq.s32.totalorder %s21, 1
      %p81 = por %p79, %p80
      %p82 = scmp.ne.s32.totalorder %s73, %s74
      %p83 = scmp.eq.s32.totalorder %s21, 0
      %p84 = por %p82, %p83
      %p85 = scmp.ne.s32.totalorder %s73, %s74
      %p86 = scmp.eq.s32.totalorder %s22, 1
      %p87 = por %p85, %p86
      %p89 = scmp.ne.s32.totalorder %s74, %s88
      %p90 = scmp.eq.s32.totalorder %s22, 0
      %p91 = por %p89, %p90
      %s92 = ssub.s32 %s16, %s23
      %p93 = scmp.eq.s32.totalorder %s92, 0
      %s95 = sadd.s32 %s94, 1
      %s96 = scalar_select %p93, %s94, %s95
      %p99 = pneg %p93
      %p100 = scmp.eq.s32.totalorder %s16, 1
      %p101 = por %p99, %p100
      %p102 = scmp.ne.s32.totalorder %s94, %s97
      %p103 = scmp.eq.s32.totalorder %s16, 0
      %p104 = por %p102, %p103
      %p105 = scmp.ne.s32.totalorder %s94, %s97
      %p106 = scmp.eq.s32.totalorder %s21, 1
      %p107 = por %p105, %p106
      %p108 = scmp.ne.s32.totalorder %s97, %s98
      %p109 = scmp.eq.s32.totalorder %s21, 0
      %p110 = por %p108, %p109
      %p111 = scmp.ne.s32.totalorder %s97, %s98
      %p112 = scmp.eq.s32.totalorder %s22, 1
      %p113 = por %p111, %p112
      %p115 = scmp.ne.s32.totalorder %s98, %s114
      %p116 = scmp.eq.s32.totalorder %s22, 0
      %p117 = por %p115, %p116
      %p118 = scmp.le.s32.totalorder 1, %s16
      %p119 = scmp.lt.s32.totalorder %s16, 3
      %p120 = pnand %p118, %p119
      %p121 = pneg %p120
      // Predicated region
      $region9: #{tpu_custom_call.1} parent=5 // pred_check
        _
      $region10: #{tpu_custom_call.1} parent=5 // pred_check_branch
        %123 = sbr.rel (%p120) target = $region12
      $region11: #{tpu_custom_call.1} parent=5 // pred_region
        %s124 = ssub.s32 %s16, 1
        // Predicated region
        $region13: #{tpu_custom_call.1} parent=11 // pred_check
          %p125 = pneg %p63
        $region14: #{tpu_custom_call.1} parent=11 // pred_check_branch
          %127 = sbr.rel (%p125) target = $region16
        $region15: #{tpu_custom_call.1} parent=11 // pred_region
          %s129 = ssub.s32 2048, 2048
          %130 = vsyncadd [#allocation6], %s129
          %s131 = sshll.u32 [#allocation5], 4
          %s132 = int_to_ptr.vmem [resolvable:$true] %s131
          %137 = dma.hbm_to_vmem [thread:$0]  %s1, 2048, %s132, [#allocation6], 128, 128, 8
        $region16: #{tpu_custom_call.1} parent=11 // pred_fallthru
          _
        // Predicated region
        $region17: #{tpu_custom_call.1} parent=11 // pred_check
          %p138 = pneg %p84
        $region18: #{tpu_custom_call.1} parent=11 // pred_check_branch
          %140 = sbr.rel (%p138) target = $region20
        $region19: #{tpu_custom_call.1} parent=11 // pred_region
          _
        $region20: #{tpu_custom_call.1} parent=11 // pred_fallthru
          _
      $region12: #{tpu_custom_call.1} parent=5 // pred_fallthru
        _
      %p141 = scmp.lt.s32.totalorder %s16, 2
      // Predicated region
      $region21: #{tpu_custom_call.1} parent=5 // pred_check
        %p142 = pneg %p141
      $region22: #{tpu_custom_call.1} parent=5 // pred_check_branch
        %144 = sbr.rel (%p142) target = $region24
      $region23: #{tpu_custom_call.1} parent=5 // pred_region
        // Predicated region
        $region25: #{tpu_custom_call.1} parent=23 // pred_check
          %p145 = pneg %p36
        $region26: #{tpu_custom_call.1} parent=23 // pred_check_branch
          %147 = sbr.rel (%p145) target = $region28
        $region27: #{tpu_custom_call.1} parent=23 // pred_region
          %s148 = sand.u32 %s26, 1
          %s149 = scalar_lea.sflag [#allocation3], %s148
          %s150 = sand.u32 %s26, 1
          %s151 = smul.addr %s150, 32
          %s152 = scalar_lea.vmem [#allocation2], %s151
          %s153 = smul.u32 4, %s16
          %s155 = ssub.s32 512, 512
          %156 = vsyncadd %s149, %s155
          %s157 = smul.addr %s153, 128
          %s158 = scalar_lea.hbm %s0, %s157
          %s159 = sshll.u32 %s152, 4
          %s160 = int_to_ptr.vmem [resolvable:$true] %s159
          %165 = dma.hbm_to_vmem [thread:$0]  %s158, 512, %s160, %s149, 128, 128, 8
        $region28: #{tpu_custom_call.1} parent=23 // pred_fallthru
          _
      $region24: #{tpu_custom_call.1} parent=5 // pred_fallthru
        _
      %p166 = scmp.le.s32.totalorder 1, %s16
      %p167 = scmp.lt.s32.totalorder %s16, 3
      %p168 = pnand %p166, %p167
      %p169 = pneg %p168
      // Predicated region
      $region29: #{tpu_custom_call.1} parent=5 // pred_check
        _
      $region30: #{tpu_custom_call.1} parent=5 // pred_check_branch
        %171 = sbr.rel (%p168) target = $region32
      $region31: #{tpu_custom_call.1} parent=5 // pred_region
        %s172 = ssub.s32 %s16, 1
        %s173 = sand.u32 %s29, 1
        %s174 = scalar_lea.sflag [#allocation3], %s173
        %s175 = sand.u32 %s29, 1
        %s176 = smul.addr %s175, 32
        %s177 = scalar_lea.vmem [#allocation2], %s176
        // Predicated region
        $region33: #{tpu_custom_call.1} parent=31 // pred_check
          %p178 = pneg %p42
        $region34: #{tpu_custom_call.1} parent=31 // pred_check_branch
          %180 = sbr.rel (%p178) target = $region36
        $region35: #{tpu_custom_call.1} parent=31 // pred_region
          %181 = dma.done %s174, 512
        $region36: #{tpu_custom_call.1} parent=31 // pred_fallthru
          _
        // Predicated region
        $region37: #{tpu_custom_call.1} parent=31 // pred_check
          %p182 = pneg %p63
        $region38: #{tpu_custom_call.1} parent=31 // pred_check_branch
          %184 = sbr.rel (%p182) target = $region40
        $region39: #{tpu_custom_call.1} parent=31 // pred_region
          %185 = dma.done [#allocation6], 2048
        $region40: #{tpu_custom_call.1} parent=31 // pred_fallthru
          _
        %s186 = sand.u32 %s29, 1
        %s187 = scalar_lea.sflag [#allocation3], %s186
        %s188 = sand.u32 %s29, 1
        %s189 = smul.addr %s188, 32
        %s190 = scalar_lea.vmem [#allocation2], %s189
        %p191 = pneg %p42
        %p192 = pneg %p39
        %p193 = pneg %p63
        %p194 = pneg %p60
        %p195 = pneg %p84
        %p196 = pneg %p81
        %p197 = pneg %p110
        %p198 = pneg %p107
        %s199 = sand.u32 %s97, 1
        %s200 = scalar_lea.sflag [#allocation4], %s199
        %s201 = sand.u32 %s97, 1
        %s202 = smul.addr %s201, 32
        %s203 = scalar_lea.vmem [#allocation7], %s202
        %s204 = smul.u32 4, %s21
        %s205 = smul.u32 4, %s21
        %v206 = vld [vmem:[%s177] sm:$0xff]
        %v207 = vld [vmem:[%s177 + $0x8] sm:$0xff]
        %v208 = vld [vmem:[%s177 + $0x10] sm:$0xff]
        %v209 = vld [vmem:[%s177 + $0x18] sm:$0xff]
        %v210 = vld [vmem:[#allocation5] sm:$0xff]
        %v211 = vld [vmem:[#allocation5 + $0x8] sm:$0xff]
        %v212 = vld [vmem:[#allocation5 + $0x10] sm:$0xff]
        %v213 = vld [vmem:[#allocation5 + $0x18] sm:$0xff]
        %v214 = vld [vmem:[#allocation5 + $0x20] sm:$0xff]
        %v215 = vld [vmem:[#allocation5 + $0x28] sm:$0xff]
        %v216 = vld [vmem:[#allocation5 + $0x30] sm:$0xff]
        %v217 = vld [vmem:[#allocation5 + $0x38] sm:$0xff]
        %v218 = vld [vmem:[#allocation5 + $0x40] sm:$0xff]
        %v219 = vld [vmem:[#allocation5 + $0x48] sm:$0xff]
        %v220 = vld [vmem:[#allocation5 + $0x50] sm:$0xff]
        %v221 = vld [vmem:[#allocation5 + $0x58] sm:$0xff]
        %v222 = vld [vmem:[#allocation5 + $0x60] sm:$0xff]
        %v223 = vld [vmem:[#allocation5 + $0x68] sm:$0xff]
        %v224 = vld [vmem:[#allocation5 + $0x70] sm:$0xff]
        %v225 = vld [vmem:[#allocation5 + $0x78] sm:$0xff]
        %v226 = vld [vmem:[%s2] sm:$0x1]
        %v228 = vlaneseq
        %v229 = vshrl.u32 %v228, 7
        %v230 = vsub.s32 0, %v229
        %v231 = vrot.slane %v226, %v230
        %233 = vmatprep.subr.mxu0 0.0
        %234 = vmatpush1.msra.mxu0 %v210
        %235 = vmatprep.subr.mxu0 0.0
        %236 = vmatpush1.msra.mxu0 %v211
        %237 = vmatprep.subr.mxu0 0.0
        %238 = vmatpush1.msra.mxu0 %v212
        %239 = vmatprep.subr.mxu0 0.0
        %240 = vmatpush1.msra.mxu0 %v213
        %241 = vmatprep.subr.mxu0 0.0
        %242 = vmatpush1.msra.mxu0 %v214
        %243 = vmatprep.subr.mxu0 0.0
        %244 = vmatpush1.msra.mxu0 %v215
        %245 = vmatprep.subr.mxu0 0.0
        %246 = vmatpush1.msra.mxu0 %v216
        %247 = vmatprep.subr.mxu0 0.0
        %248 = vmatpush1.msra.mxu0 %v217
        %249 = vmatprep.subr.mxu0 0.0
        %250 = vmatpush1.msra.mxu0 %v218
        %251 = vmatprep.subr.mxu0 0.0
        %252 = vmatpush1.msra.mxu0 %v219
        %253 = vmatprep.subr.mxu0 0.0
        %254 = vmatpush1.msra.mxu0 %v220
        %255 = vmatprep.subr.mxu0 0.0
        %256 = vmatpush1.msra.mxu0 %v221
        %257 = vmatprep.subr.mxu0 0.0
        %258 = vmatpush1.msra.mxu0 %v222
        %259 = vmatprep.subr.mxu0 0.0
        %260 = vmatpush1.msra.mxu0 %v223
        %261 = vmatprep.subr.mxu0 0.0
        %262 = vmatpush1.msra.mxu0 %v224
        %263 = vmatprep.subr.mxu0 0.0
        %264 = vmatpush1.msra.mxu0 %v225
        %265 = vmatprep.subr.mxu0 0.0
        %266 = vmatpush1.msra.mxu0 0.0
        %267 = vmatprep.subr.mxu0 0.0
        %268 = vmatpush1.msra.mxu0 0.0
        %269 = vmatprep.subr.mxu0 0.0
        %270 = vmatpush1.msra.mxu0 0.0
        %271 = vmatprep.subr.mxu0 0.0
        %272 = vmatpush1.msra.mxu0 0.0
        %273 = vmatprep.subr.mxu0 0.0
        %274 = vmatpush1.msra.mxu0 0.0
        %275 = vmatprep.subr.mxu0 0.0
        %276 = vmatpush1.msra.mxu0 0.0
        %277 = vmatprep.subr.mxu0 0.0
        %278 = vmatpush1.msra.mxu0 0.0
        %279 = vmatprep.subr.mxu0 0.0
        %280 = vmatpush1.msra.mxu0 0.0
        %281 = vmatprep.subr.mxu0 0.0
        %282 = vmatpush1.msra.mxu0 0.0
        %283 = vmatprep.subr.mxu0 0.0
        %284 = vmatpush1.msra.mxu0 0.0
        %285 = vmatprep.subr.mxu0 0.0
        %286 = vmatpush1.msra.mxu0 0.0
        %287 = vmatprep.subr.mxu0 0.0
        %288 = vmatpush1.msra.mxu0 0.0
        %289 = vmatprep.subr.mxu0 0.0
        %290 = vmatpush1.msra.mxu0 0.0
        %291 = vmatprep.subr.mxu0 0.0
        %292 = vmatpush1.msra.mxu0 0.0
        %293 = vmatprep.subr.mxu0 0.0
        %294 = vmatpush1.msra.mxu0 0.0
        %295 = vmatprep.subr.mxu0 0.0
        %296 = vmatpush1.msra.mxu0 0.0
        %297 = vmatprep.mubr.f32.mxu0 0.0
        %298 = vmatmul.mubr.f32.gmra.mrb[0].mxu0 %v206
        %v299 = vpop.f32.mrb[0].mxu0
        %v300 = vadd.f32 %v231, %v299
        %v301 = vpop.f32.mrb[0].mxu0
        %302 = vmatprep.mubr.f32.mxu0 0.0
        %303 = vmatmul.mubr.f32.gmra.mrb[0].mxu0 %v207
        %v304 = vpop.f32.mrb[0].mxu0
        %v305 = vadd.f32 %v231, %v304
        %v306 = vpop.f32.mrb[0].mxu0
        %307 = vmatprep.mubr.f32.mxu0 0.0
        %308 = vmatmul.mubr.f32.gmra.mrb[0].mxu0 %v208
        %v309 = vpop.f32.mrb[0].mxu0
        %v310 = vadd.f32 %v231, %v309
        %v311 = vpop.f32.mrb[0].mxu0
        %312 = vmatprep.mubr.f32.mxu0 0.0
        %313 = vmatmul.mubr.f32.gmra.mrb[0].mxu0 %v209
        %v314 = vpop.f32.mrb[0].mxu0
        %v315 = vadd.f32 %v231, %v314
        %v316 = vpop.f32.mrb[0].mxu0
        %317 = vdwg.mxu0
        %318 = vst [vmem:[%s203] sm:$0xff] %v300
        %319 = vst [vmem:[%s203 + $0x8] sm:$0xff] %v305
        %320 = vst [vmem:[%s203 + $0x10] sm:$0xff] %v310
        %321 = vst [vmem:[%s203 + $0x18] sm:$0xff] %v315
        %s322 = sand.u32 %s97, 1
        %s323 = scalar_lea.sflag [#allocation4], %s322
        %s324 = sand.u32 %s97, 1
        %s325 = smul.addr %s324, 32
        %s326 = scalar_lea.vmem [#allocation7], %s325
        // Predicated region
        $region41: #{tpu_custom_call.1} parent=31 // pred_check
          %p327 = pneg %p107
        $region42: #{tpu_custom_call.1} parent=31 // pred_check_branch
          %329 = sbr.rel (%p327) target = $region44
        $region43: #{tpu_custom_call.1} parent=31 // pred_region
          %s330 = smul.u32 4, %s21
          %s332 = ssub.s32 512, 512
          %333 = vsyncadd %s323, %s332
          %s334 = smul.addr %s330, 128
          %s335 = scalar_lea.hbm %s3, %s334
          %s336 = sshll.u32 %s326, 4
          %s337 = int_to_ptr.vmem [resolvable:$true] %s336
          %342 = dma.vmem_to_hbm [thread:$0]  %s337, 512, %s335, %s323, 128, 128, 8
        $region44: #{tpu_custom_call.1} parent=31 // pred_fallthru
          _
      $region32: #{tpu_custom_call.1} parent=5 // pred_fallthru
        _
      %p343 = scmp.le.s32.totalorder 2, %s16
      // Predicated region
      $region45: #{tpu_custom_call.1} parent=5 // pred_check
        %p344 = pneg %p343
      $region46: #{tpu_custom_call.1} parent=5 // pred_check_branch
        %346 = sbr.rel (%p344) target = $region48
      $region47: #{tpu_custom_call.1} parent=5 // pred_region
        %s347 = ssub.s32 %s16, 2
        // Predicated region
        $region49: #{tpu_custom_call.1} parent=47 // pred_check
          %p348 = pneg %p113
        $region50: #{tpu_custom_call.1} parent=47 // pred_check_branch
          %350 = sbr.rel (%p348) target = $region52
        $region51: #{tpu_custom_call.1} parent=47 // pred_region
          %s351 = sand.u32 %s98, 1
          %s352 = scalar_lea.sflag [#allocation4], %s351
          %s353 = sand.u32 %s98, 1
          %s354 = smul.addr %s353, 32
          %s355 = scalar_lea.vmem [#allocation7], %s354
          %356 = dma.done %s352, 512
        $region52: #{tpu_custom_call.1} parent=47 // pred_fallthru
          _
      $region48: #{tpu_custom_call.1} parent=5 // pred_fallthru
        _
    $region6: #{tpu_custom_call.1} parent=1 // loop_footer
      %s20 = sadd.s32 1, %s16
    $region7: #{tpu_custom_call.1} parent=1 // loop_footer_branch
      %15 = sbr.rel target = $region3
    $region8: #{tpu_custom_call.1} parent=1 // loop_exit
      _
    %357 = vsyncpa [#allocation3], 1
    %s358 = scalar_lea.sflag [#allocation3], 1
    %359 = vsyncpa %s358, 1
    %360 = vsyncpa [#allocation6], 1
    %361 = vsyncpa [#allocation4], 1
    %s362 = scalar_lea.sflag [#allocation4], 1
    %363 = vsyncpa %s362, 1

</llo_original>
